<compile_context>
chip_gen: v7x
topology: tpu7x:2x2x1
jax: 0.10.0
libtpu: 0.0.40
codegen_flags: <defaults>
</compile_context>

<pallas_src>
import functools

import jax
import jax.numpy as jnp
from jax import lax
from jax.experimental import pallas as pl
from jax.experimental.pallas import tpu as pltpu


def _round_up(x, m):
    return (x + m - 1) // m * m


def _vmem_capacity_bytes():
    """Physical VMEM of the current TPU generation; conservative fallback."""
    try:
        info = pltpu.get_tpu_info()
        cap = getattr(info, "vmem_capacity_bytes", None)
        if cap:
            return int(cap)
    except Exception:
        pass
    return 64 << 20  # v7x per-TensorCore VMEM = smallest across supported generations


def _choose_tile_s(seq_len, hidden_dim, itemsize, vmem_cap):
    """Rows of encoder_outputs per grid step, from a byte budget (not a row cap).

    The kernel is purely HBM-bound: bigger tiles amortize the ~0.35 us per-grid-step
    overhead, while 2x the tile (double buffering) must stay well inside scoped VMEM.
    """
    per_buf_budget = (4 << 20) if vmem_cap >= (96 << 20) else (2 << 20)
    rows = per_buf_budget // max(1, hidden_dim * itemsize)
    rows = max(128, (rows // 128) * 128)          # lane-dense score rows, sublane-aligned tiles
    rows = min(rows, max(128, _round_up(seq_len, 128)))   # never exceed the (padded) sequence
    return int(rows)


def _attn_scores_softmax_kernel(v_ref, enc_ref, out_ref, *, valid_s, tile_s):
    """One grid step: score a tile_s slab of encoder outputs; softmax on the last step.

    v_ref:   [1, H]               enc dtype  (v = W^T @ hidden, precomputed in the wrapper)
    enc_ref: [tile_s, H]          enc dtype  (streamed tile; boundary block may hold garbage rows)
    out_ref: [num_tiles, tile_s]  f32        (VMEM-resident across the whole grid:
                                              raw scores until the last step, weights after)
    """
    i = pl.program_id(0)

    # Scores for this tile: v . enc_row  ->  [1, tile_s] (seq on lanes), f32 MXU accumulate.
    scores = lax.dot_general(
        v_ref[...], enc_ref[...],
        dimension_numbers=(((1,), (1,)), ((), ())),
        preferred_element_type=jnp.float32,
    )
    out_ref[pl.ds(i, 1), :] = scores

    # Last step: masked softmax over the whole (num_tiles, tile_s) score buffer, in place.
    @pl.when(i == pl.num_programs(0) - 1)
    def _():
        s = out_ref[...]                                        # [num_tiles, tile_s]
        row = lax.broadcasted_iota(jnp.int32, s.shape, 0)
        lane = lax.broadcasted_iota(jnp.int32, s.shape, 1)
        pos = row * tile_s + lane                               # flattened sequence position
        s = jnp.where(pos < valid_s, s, -jnp.inf)               # mask padded / garbage slots
        m = jnp.max(s, axis=1, keepdims=True)
        m = jnp.max(m, axis=0, keepdims=True)                   # global max, shape (1, 1)
        e = jnp.exp(s - m)
        denom = jnp.sum(e, axis=1, keepdims=True)
        denom = jnp.sum(denom, axis=0, keepdims=True)           # global sum, shape (1, 1)
        out_ref[...] = e * (1.0 / denom)                        # exact normalization


def attn_forward(hidden, encoder_outputs, w, b, *, tile_s=None):
    """Attn(method='general').forward.

    hidden: [H], encoder_outputs: [S, H] (f32 or bf16), w: [H, H] (torch [out, in]),
    b: [H]  ->  [1, 1, S] softmax attention weights.
    """
    del b  # hidden.b is a constant offset to every score; cancels exactly under softmax
    H = hidden.shape[-1]
    S = encoder_outputs.shape[0]

    # Tiny [1,H]x[H,H] matvec stays in plain JAX; W never enters the kernel.
    v = jnp.dot(hidden.astype(jnp.float32).reshape(1, H), w.astype(jnp.float32),
                precision=lax.Precision.HIGHEST)                # [1, H] f32
    v = v.astype(encoder_outputs.dtype)                         # native MXU dtype; f32 accumulate

    cap = _vmem_capacity_bytes()
    itemsize = encoder_outputs.dtype.itemsize
    if tile_s is None:
        tile_s = _choose_tile_s(S, H, itemsize, cap)
    else:
        tile_s = max(128, _round_up(int(tile_s), 128))
    num_tiles = pl.cdiv(S, tile_s)

    # Declare the VMEM working set (2x streamed enc tile + resident score buffer + v).
    enc_tile_bytes = tile_s * H * itemsize
    out_bytes = num_tiles * tile_s * 4
    needed = 2 * enc_tile_bytes + 2 * out_bytes + 2 * H * itemsize + (2 << 20)
    vmem_limit = int(min(max(needed, 32 << 20), (cap * 3) // 4))

    kernel = functools.partial(_attn_scores_softmax_kernel, valid_s=S, tile_s=tile_s)

    out = pl.pallas_call(
        kernel,
        out_shape=jax.ShapeDtypeStruct((num_tiles, tile_s), jnp.float32),
        grid_spec=pltpu.PrefetchScalarGridSpec(
            num_scalar_prefetch=0,
            grid=(num_tiles,),
            in_specs=[
                pl.BlockSpec((1, H), lambda i: (0, 0)),          # v: VMEM-resident
                pl.BlockSpec((tile_s, H), lambda i: (i, 0)),     # enc: streamed, double-buffered
            ],
            out_specs=pl.BlockSpec((num_tiles, tile_s), lambda i: (0, 0)),  # resident accumulator
        ),
        compiler_params=pltpu.CompilerParams(
            # output block is revisited across the seq axis -> reduction-style axis
            dimension_semantics=("arbitrary",),
            vmem_limit_bytes=vmem_limit,
        ),
    )(v, encoder_outputs)

    # .unsqueeze(0).unsqueeze(0) on the [S] softmax vector -> [1, 1, S]
    return out.reshape(-1)[:S].reshape(1, 1, S)


def reference_forward(hidden, encoder_outputs, w, b):
    enc = encoder_outputs.astype(jnp.float32)
    energy = jnp.dot(enc, w.T, precision=lax.Precision.HIGHEST) + b   # [S, H]
    scores = jnp.dot(energy, hidden, precision=lax.Precision.HIGHEST) # [S]
    return jax.nn.softmax(scores).reshape(1, 1, -1)


if __name__ == "__main__":
    hidden_dim = 32
    key = jax.random.PRNGKey(0)
    k1, k2, k3, k4, k5 = jax.random.split(key, 5)

    # deterministic synthetic parameters (nn.Linear(hidden_dim, hidden_dim))
    w = jax.random.normal(k1, (hidden_dim, hidden_dim), jnp.float32) * 0.1
    b = jax.random.normal(k2, (hidden_dim,), jnp.float32) * 0.1
    hidden = jax.random.normal(k3, (hidden_dim,), jnp.float32)

    # --- Case 1: module-sized shapes (S=8, H=32), encoder outputs kept in bf16 ---
    seq_len = 8
    enc_bf16 = jax.random.normal(k4, (seq_len, hidden_dim), jnp.float32).astype(jnp.bfloat16)

    out = attn_forward(hidden, enc_bf16, w, b)
    out = jax.block_until_ready(out)
    ref = reference_forward(hidden, enc_bf16, w, b)
    assert out.shape == (1, 1, seq_len), out.shape
    assert jnp.allclose(jnp.sum(out), 1.0, atol=1e-3), jnp.sum(out)
    # bf16 enc + bf16 v -> ~1e-2-level tolerance vs the f32 reference
    assert jnp.allclose(out, ref, atol=2e-2, rtol=2e-2), (out, ref)

    # --- Case 2: multi-tile path, S not a multiple of tile_s (boundary-block masking) ---
    seq_len2 = 300
    enc_f32 = jax.random.normal(k5, (seq_len2, hidden_dim), jnp.float32)

    out2 = attn_forward(hidden, enc_f32, w, b, tile_s=128)   # forces grid of 3 tiles
    out2 = jax.block_until_ready(out2)
    ref2 = reference_forward(hidden, enc_f32, w, b)
    assert out2.shape == (1, 1, seq_len2), out2.shape
    assert jnp.allclose(jnp.sum(out2), 1.0, atol=1e-3), jnp.sum(out2)
    assert jnp.allclose(out2, ref2, atol=5e-3, rtol=2e-2), (out2, ref2)

    print("KERNEL_OK")
</pallas_src>

<mosaic_0001>
module attributes {stable_mosaic.version = 11 : i64} {
  func.func @_attn_scores_softmax_kernel(%arg0: i32, %arg1: memref<1x32xbf16, #tpu.memory_space<vmem>>, %arg2: memref<128x32xbf16, #tpu.memory_space<vmem>>, %arg3: memref<1x128xf32, #tpu.memory_space<vmem>>) attributes {dimension_semantics = [#tpu.dimension_semantics<arbitrary>], iteration_bounds = array<i64: 1>, scalar_prefetch = 0 : i64, scratch_operands = 0 : i64, tpu.core_type = #tpu.core_type<tc>, window_params = [{pipeline_mode = #tpu.pipeline_mode<synchronous>, transform_indices = @transform_0, window_bounds = array<i64: 1, 32>}, {transform_indices = @transform_1, window_bounds = array<i64: 128, 32>}, {pipeline_mode = #tpu.pipeline_mode<synchronous>, transform_indices = @transform_2, window_bounds = array<i64: 1, 128>}]} {
    %c0 = arith.constant 0 : index
    %c0_0 = arith.constant 0 : index
    %0 = vector.load %arg1[%c0, %c0_0] : memref<1x32xbf16, #tpu.memory_space<vmem>>, vector<1x32xbf16>
    %c0_1 = arith.constant 0 : index
    %c0_2 = arith.constant 0 : index
    %1 = vector.load %arg2[%c0_1, %c0_2] : memref<128x32xbf16, #tpu.memory_space<vmem>>, vector<128x32xbf16>
    %cst = arith.constant dense<0.000000e+00> : vector<1x128xf32>
    %2 = tpu.matmul %0, %1, %cst {dimension_numbers = #tpu.dot_dimension_numbers<[1], [1], [0], [0], [0, 0, 1, 0], [], []>} : vector<1x32xbf16>, vector<128x32xbf16>, vector<1x128xf32> -> vector<1x128xf32>
    %3 = arith.index_cast %arg0 : i32 to index
    %c0_3 = arith.constant 0 : index
    %4 = vector.load %arg3[%3, %c0_3] : memref<1x128xf32, #tpu.memory_space<vmem>>, vector<1x128xf32>
    tpu.vector_store %arg3[%3, %c0_3], %2 {strides = array<i32>} : memref<1x128xf32, #tpu.memory_space<vmem>>, vector<1x128xf32>,
    %c0_i32 = arith.constant 0 : i32
    %5 = arith.cmpi eq, %arg0, %c0_i32 : i32
    %6 = arith.extui %5 : i1 to i32
    %c0_i32_4 = arith.constant 0 : i32
    %7 = arith.cmpi ne, %6, %c0_i32_4 : i32
    scf.if %7 {
      %c0_5 = arith.constant 0 : index
      %c0_6 = arith.constant 0 : index
      %8 = vector.load %arg3[%c0_5, %c0_6] : memref<1x128xf32, #tpu.memory_space<vmem>>, vector<1x128xf32>
      %9 = tpu.iota {dimensions = array<i32: 0>} : vector<1x128xi32>
      %10 = tpu.iota {dimensions = array<i32: 1>} : vector<1x128xi32>
      %c128_i32 = arith.constant 128 : i32
      %11 = vector.broadcast %c128_i32 : i32 to vector<1x128xi32>
      %12 = arith.muli %9, %11 : vector<1x128xi32>
      %13 = arith.addi %12, %10 : vector<1x128xi32>
      %c8_i32 = arith.constant 8 : i32
      %14 = vector.broadcast %c8_i32 : i32 to vector<1x128xi32>
      %15 = arith.cmpi slt, %13, %14 : vector<1x128xi32>
      %cst_7 = arith.constant 0xFF800000 : f32
      %16 = vector.broadcast %cst_7 : f32 to vector<1x128xf32>
      %17 = arith.select %15, %8, %16 : vector<1x128xi1>, vector<1x128xf32>
      %cst_8 = arith.constant dense<0xFF800000> : vector<1xf32>
      %18 = vector.multi_reduction <maximumf>, %17, %cst_8 [1] : vector<1x128xf32> to vector<1xf32>
      %19 = vector.shape_cast %18 : vector<1xf32> to vector<1x1xf32>
      %cst_9 = arith.constant dense<0xFF800000> : vector<1xf32>
      %20 = vector.multi_reduction <maximumf>, %19, %cst_9 [0] : vector<1x1xf32> to vector<1xf32>
      %21 = vector.shape_cast %20 : vector<1xf32> to vector<1x1xf32>
      %22 = vector.broadcast %21 : vector<1x1xf32> to vector<1x128xf32>
      %23 = arith.subf %17, %22 : vector<1x128xf32>
      %24 = math.exp %23 : vector<1x128xf32>
      %cst_10 = arith.constant dense<0.000000e+00> : vector<1xf32>
      %25 = vector.multi_reduction <add>, %24, %cst_10 [1] : vector<1x128xf32> to vector<1xf32>
      %26 = vector.shape_cast %25 : vector<1xf32> to vector<1x1xf32>
      %cst_11 = arith.constant dense<0.000000e+00> : vector<1xf32>
      %27 = vector.multi_reduction <add>, %26, %cst_11 [0] : vector<1x1xf32> to vector<1xf32>
      %28 = vector.shape_cast %27 : vector<1xf32> to vector<1x1xf32>
      %cst_12 = arith.constant 1.000000e+00 : f32
      %29 = vector.broadcast %cst_12 : f32 to vector<1x1xf32>
      %30 = arith.divf %29, %28 : vector<1x1xf32>
      %31 = vector.broadcast %30 : vector<1x1xf32> to vector<1x128xf32>
      %32 = arith.mulf %24, %31 : vector<1x128xf32>
      %c0_13 = arith.constant 0 : index
      %c0_14 = arith.constant 0 : index
      %33 = vector.load %arg3[%c0_13, %c0_14] : memref<1x128xf32, #tpu.memory_space<vmem>>, vector<1x128xf32>
      tpu.vector_store %arg3[%c0_13, %c0_14], %32 {strides = array<i32>} : memref<1x128xf32, #tpu.memory_space<vmem>>, vector<1x128xf32>,
    } else {
    }
    return
  }
  func.func @transform_0(%arg0: i32) -> (i32, i32) {
    %c0_i32 = arith.constant 0 : i32
    %c0_i32_0 = arith.constant 0 : i32
    %c0_i32_1 = arith.constant 0 : i32
    return %c0_i32, %c0_i32_0 : i32, i32
  }
  func.func @transform_1(%arg0: i32) -> (i32, i32) {
    %c0_i32 = arith.constant 0 : i32
    %c0_i32_0 = arith.constant 0 : i32
    return %arg0, %c0_i32 : i32, i32
  }
  func.func @transform_2(%arg0: i32) -> (i32, i32) {
    %c0_i32 = arith.constant 0 : i32
    %c0_i32_0 = arith.constant 0 : i32
    %c0_i32_1 = arith.constant 0 : i32
    return %c0_i32, %c0_i32_0 : i32, i32
  }
}

</mosaic_0001>

<llo_original>
// kernel: tpu_custom_call.1
$region0: #{tpu_custom_call.1}
  #allocation0 [shape = 'u32[]', space=smem, size = 0x4, offset = 0x4, fixed_abs, tag = 'smem constant byte address 0x4 - core index']
  #allocation1 [shape = 'u32[144,128]{1,0:T(1,128)}', space=vmem, size = 0x12000, scoped, tag = 'internal scratch']
  %s0 = inlined_call_operand.hbm [shape: bf16[1,32], index: 0, kind: input, shape index: {}]
  %s1 = inlined_call_operand.hbm [shape: bf16[8,32], index: 1, kind: input, shape index: {}]
  %s2 = inlined_call_operand.hbm [shape: f32[1,128], index: 2, kind: output, shape index: {}]
  %s3 = sld [smem:[#allocation0]]
  $region30: #{tpu_custom_call.1} parent=0
    _
  %s5 = ssub.s32 1, %s3
  %s6 = scalar_select 0, %s5, %s3
  $region1: #{tpu_custom_call.1} parent=0
    #allocation2 [shape = 'u8[512]{0}', space=vmem, size = 0x400, scoped, tag = 'input window, operand 0, single buffered']
    #allocation3 [shape = 's32[1]{0}', space=sflag, size = 0x4, scoped, tag = 'scoped memory for tpu_custom_call.1']
    #allocation4 [shape = 's32[1]{0}', space=sflag, size = 0x4, scoped, tag = 'scoped memory for tpu_custom_call.1']
    #allocation5 [shape = 'u8[32768]{0}', space=vmem, size = 0x8000, scoped, tag = 'input window, operand 1, single buffered']
    #allocation6 [shape = 's32[1]{0}', space=sflag, size = 0x4, scoped, tag = 'scoped memory for tpu_custom_call.1']
    #allocation7 [shape = 'u8[512]{0}', space=vmem, size = 0x400, scoped, tag = 'output window, operand 0, single buffered']
    %7 = vsyncpa [#allocation3], 0
    %8 = vsyncpa [#allocation6], 0
    %9 = vsyncpa [#allocation4], 0
    // Predicated region
    $region2: #{tpu_custom_call.1} parent=1 // pred_check
      _
    $region3: #{tpu_custom_call.1} parent=1 // pred_check_branch
      %11 = sbr.rel (0) target = $region5
    $region4: #{tpu_custom_call.1} parent=1 // pred_region
      %s13 = ssub.s32 16, 16
      %14 = vsyncadd [#allocation3], %s13
      %s16 = sshll.u32 [#allocation2], 4
      %s17 = int_to_ptr.vmem [resolvable:$true] %s16
      %19 = dma.hbm_to_vmem [thread:$0]  %s0, 16, %s17, [#allocation3]
    $region5: #{tpu_custom_call.1} parent=1 // pred_fallthru
      _
    // Predicated region
    $region6: #{tpu_custom_call.1} parent=1 // pred_check
      _
    $region7: #{tpu_custom_call.1} parent=1 // pred_check_branch
      %21 = sbr.rel (0) target = $region9
    $region8: #{tpu_custom_call.1} parent=1 // pred_region
      %s23 = ssub.s32 1024, 64
      %24 = vsyncadd [#allocation6], %s23
      %s25 = sshll.u32 [#allocation5], 4
      %s26 = int_to_ptr.vmem [resolvable:$true] %s25
      %31 = dma.hbm_to_vmem [thread:$0]  %s1, 64, %s26, [#allocation6], 64, 64, 4
    $region9: #{tpu_custom_call.1} parent=1 // pred_fallthru
      _
    // Predicated region
    $region10: #{tpu_custom_call.1} parent=1 // pred_check
      _
    $region11: #{tpu_custom_call.1} parent=1 // pred_check_branch
      %33 = sbr.rel (0) target = $region13
    $region12: #{tpu_custom_call.1} parent=1 // pred_region
      %34 = dma.done [#allocation3], 16
    $region13: #{tpu_custom_call.1} parent=1 // pred_fallthru
      _
    // Predicated region
    $region14: #{tpu_custom_call.1} parent=1 // pred_check
      _
    $region15: #{tpu_custom_call.1} parent=1 // pred_check_branch
      %36 = sbr.rel (0) target = $region17
    $region16: #{tpu_custom_call.1} parent=1 // pred_region
      %37 = dma.done [#allocation6], 1024
    $region17: #{tpu_custom_call.1} parent=1 // pred_fallthru
      _
    %v39 = vld [vmem:[#allocation2] sm:$0x1]
    %v40 = vld [vmem:[#allocation5] sm:$0xf]
    %v41 = vld [vmem:[#allocation5 + $0x4] sm:$0xf]
    %v42 = vld [vmem:[#allocation5 + $0x8] sm:$0xf]
    %v43 = vld [vmem:[#allocation5 + $0xc] sm:$0xf]
    %v44 = vld [vmem:[#allocation5 + $0x10] sm:$0xf]
    %v45 = vld [vmem:[#allocation5 + $0x14] sm:$0xf]
    %v46 = vld [vmem:[#allocation5 + $0x18] sm:$0xf]
    %v47 = vld [vmem:[#allocation5 + $0x1c] sm:$0xf]
    %v48 = vld [vmem:[#allocation5 + $0x20] sm:$0xf]
    %v49 = vld [vmem:[#allocation5 + $0x24] sm:$0xf]
    %v50 = vld [vmem:[#allocation5 + $0x28] sm:$0xf]
    %v51 = vld [vmem:[#allocation5 + $0x2c] sm:$0xf]
    %v52 = vld [vmem:[#allocation5 + $0x30] sm:$0xf]
    %v53 = vld [vmem:[#allocation5 + $0x34] sm:$0xf]
    %v54 = vld [vmem:[#allocation5 + $0x38] sm:$0xf]
    %v55 = vld [vmem:[#allocation5 + $0x3c] sm:$0xf]
    %v72 = vunpack.c.l.b16 %v40
    %v73 = vunpack.c.l.b16 %v41
    %v74 = vunpack.c.l.b16 %v42
    %v75 = vunpack.c.l.b16 %v43
    %v76 = vunpack.c.l.b16 %v44
    %v77 = vunpack.c.l.b16 %v45
    %v78 = vunpack.c.l.b16 %v46
    %v79 = vunpack.c.l.b16 %v47
    %v80 = vunpack.c.l.b16 %v48
    %v81 = vunpack.c.l.b16 %v49
    %v82 = vunpack.c.l.b16 %v50
    %v83 = vunpack.c.l.b16 %v51
    %v84 = vunpack.c.l.b16 %v52
    %v85 = vunpack.c.l.b16 %v53
    %v86 = vunpack.c.l.b16 %v54
    %v87 = vunpack.c.l.b16 %v55
    %v88 = vpack.c.b16 %v73, %v72
    %v89 = vpack.c.b16 %v75, %v74
    %v90 = vpack.c.b16 %v77, %v76
    %v91 = vpack.c.b16 %v79, %v78
    %v92 = vpack.c.b16 %v81, %v80
    %v93 = vpack.c.b16 %v83, %v82
    %v94 = vpack.c.b16 %v85, %v84
    %v95 = vpack.c.b16 %v87, %v86
    %vm96 = vcmask 261120
    %v98 = vsel %vm96, %v39, 0
    %v101 = vsel %vm96, %v88, 0
    %v104 = vsel %vm96, %v89, 0
    %v107 = vsel %vm96, %v90, 0
    %v110 = vsel %vm96, %v91, 0
    %v113 = vsel %vm96, %v92, 0
    %v116 = vsel %vm96, %v93, 0
    %v119 = vsel %vm96, %v94, 0
    %v122 = vsel %vm96, %v95, 0
    %124 = vmatprep.subr.bf16.mxu0 0
    %125 = vmatpush1.bf16.xpose.msra.mxu0 %v101
    %126 = vmatprep.subr.bf16.mxu0 0
    %127 = vmatpush1.bf16.xpose.msra.mxu0 %v104
    %128 = vmatprep.subr.bf16.mxu0 0
    %129 = vmatpush1.bf16.xpose.msra.mxu0 %v107
    %130 = vmatprep.subr.bf16.mxu0 0
    %131 = vmatpush1.bf16.xpose.msra.mxu0 %v110
    %132 = vmatprep.subr.bf16.mxu0 0
    %133 = vmatpush1.bf16.xpose.msra.mxu0 %v113
    %134 = vmatprep.subr.bf16.mxu0 0
    %135 = vmatpush1.bf16.xpose.msra.mxu0 %v116
    %136 = vmatprep.subr.bf16.mxu0 0
    %137 = vmatpush1.bf16.xpose.msra.mxu0 %v119
    %138 = vmatprep.subr.bf16.mxu0 0
    %139 = vmatpush1.bf16.xpose.msra.mxu0 %v122
    %140 = vmatprep.subr.bf16.mxu0 0
    %141 = vmatpush1.bf16.xpose.msra.mxu0 0
    %142 = vmatprep.subr.bf16.mxu0 0
    %143 = vmatpush1.bf16.xpose.msra.mxu0 0
    %144 = vmatprep.subr.bf16.mxu0 0
    %145 = vmatpush1.bf16.xpose.msra.mxu0 0
    %146 = vmatprep.subr.bf16.mxu0 0
    %147 = vmatpush1.bf16.xpose.msra.mxu0 0
    %148 = vmatprep.subr.bf16.mxu0 0
    %149 = vmatpush1.bf16.xpose.msra.mxu0 0
    %150 = vmatprep.subr.bf16.mxu0 0
    %151 = vmatpush1.bf16.xpose.msra.mxu0 0
    %152 = vmatprep.subr.bf16.mxu0 0
    %153 = vmatpush1.bf16.xpose.msra.mxu0 0
    %154 = vmatprep.subr.bf16.mxu0 0
    %155 = vmatpush1.bf16.xpose.msra.mxu0 0
    %156 = vmatprep.mubr.bf16.mxu0 0
    %157 = vmatmul.mubr.bf16.gmra.mrb[0].mxu0 %v98
    %v158 = vpop.f32.mrb[0].mxu0
    %v159 = vadd.f32 0.0, %v158
    %v160 = vpop.f32.mrb[0].mxu0
    %v161 = vpop.f32.mrb[0].mxu0
    %v162 = vpop.f32.mrb[0].mxu0
    %163 = vdwg.mxu0
    %164 = vst [vmem:[#allocation7] sm:$0x1] %v159
    %p165 = scmp.eq.s32.totalorder 0, 0
    // Predicated region
    $region18: #{tpu_custom_call.1} parent=1 // pred_check
      %p166 = pneg %p165
    $region19: #{tpu_custom_call.1} parent=1 // pred_check_branch
      %168 = sbr.rel (%p166) target = $region21
    $region20: #{tpu_custom_call.1} parent=1 // pred_region
      %v169 = vld [vmem:[#allocation7] sm:$0x1]
      %v170 = vlaneseq
      %v171 = vshrl.u32 %v170, 7
      %v172 = vlaneseq
      %v173 = vand.u32 %v172, 127
      %v174 = vmul.u32 %v171, 128
      %v175 = vadd.s32 %v174, %v173
      %vm176 = vcmp.lt.s32.totalorder %v175, 8
      %v177 = vsel %vm176, %v169, -inf
      %vm178 = vcmask 1040384
      %v179 = vsel %vm178, %v177, -inf
      %180 = vmax.xlane.f32.xlu0 %v179
      %v181 = vpop.xlane.xlu0 %180
      %v182 = vsub.f32 %v177, %v181
      %v183 = vmul.f32 %v182, 1.442695
      %v184 = vpow.pop %v183
      %v185 = vsel %vm178, %v184, 0.0
      %186 = vadd.xlane.f32.xlu0 %v185
      %v187 = vpop.xlane.xlu0 %186
      %v188 = vadd.f32 %v187, 0.0
      %v189 = vrcp.pop %v188
      %v190 = vmul.f32 1.0, %v189
      %v191 = vmul.f32 %v184, %v190
      %192 = vst [vmem:[#allocation7] sm:$0x1] %v191
    $region21: #{tpu_custom_call.1} parent=1 // pred_fallthru
      _
    // Predicated region
    $region22: #{tpu_custom_call.1} parent=1 // pred_check
      _
    $region23: #{tpu_custom_call.1} parent=1 // pred_check_branch
      %194 = sbr.rel (0) target = $region25
    $region24: #{tpu_custom_call.1} parent=1 // pred_region
      %s196 = ssub.s32 16, 16
      %197 = vsyncadd [#allocation4], %s196
      %s199 = sshll.u32 [#allocation7], 4
      %s200 = int_to_ptr.vmem [resolvable:$true] %s199
      %202 = dma.vmem_to_hbm [thread:$0]  %s200, 16, %s2, [#allocation4]
    $region25: #{tpu_custom_call.1} parent=1 // pred_fallthru
      _
    // Predicated region
    $region26: #{tpu_custom_call.1} parent=1 // pred_check
      _
    $region27: #{tpu_custom_call.1} parent=1 // pred_check_branch
      %204 = sbr.rel (0) target = $region29
    $region28: #{tpu_custom_call.1} parent=1 // pred_region
      %205 = dma.done [#allocation4], 16
    $region29: #{tpu_custom_call.1} parent=1 // pred_fallthru
      _
    %206 = vsyncpa [#allocation3], 1
    %207 = vsyncpa [#allocation6], 1
    %208 = vsyncpa [#allocation4], 1

</llo_original>
